<compile_context>
chip_gen: v7x
topology: tpu7x:2x2x1
jax: 0.10.0
libtpu: 0.0.40
codegen_flags: <defaults>
</compile_context>

<pallas_src>
import functools

import jax
import jax.numpy as jnp
from jax.experimental import pallas as pl
from jax.experimental.pallas import tpu as pltpu


def _round_up(n, m):
    return ((n + m - 1) // m) * m


def _softplus(z):
    # Numerically stable softplus (exp/log land on the EUP slot).
    return jnp.maximum(z, 0.0) + jnp.log1p(jnp.exp(-jnp.abs(z)))


def beta_heads_kernel(x_ref, w_ref, b_ref, ab_ref):
    # Fused, lane-padded alpha/beta heads: one bf16 MXU pass with f32
    # accumulation, f32 bias add, softplus + 1, single full-width (128-lane
    # dense) store in the caller-requested storage dtype.
    z = jnp.dot(x_ref[...].astype(jnp.bfloat16), w_ref[...],
                preferred_element_type=jnp.float32) + b_ref[...]
    ab_ref[...] = (_softplus(z) + 1.0).astype(ab_ref.dtype)


def fuse_params(w_alpha, b_alpha, w_beta, b_beta):
    """One-time parameter prep (off the per-call hot path).

    w_*: [D_out, D_in] (PyTorch Linear layout); b_*: [D_out].
    Returns:
      w_fused [D_in, P] bf16 and b_fused [1, P] f32, where
      P = round_up(2*D_out, 128), so the kernel output slab is an exact
      multiple of 128 lanes (unmasked vector stores).  Padded columns are zero.
    """
    d_out, d_in = w_alpha.shape
    two = 2 * d_out
    p = _round_up(two, 128)
    w = jnp.concatenate([w_alpha.T, w_beta.T], axis=1)            # [D_in, 2*D_out]
    w = jnp.pad(w, ((0, 0), (0, p - two)))
    b = jnp.pad(jnp.concatenate([b_alpha, b_beta]), (0, p - two)).reshape(1, -1)
    return w.astype(jnp.bfloat16), b.astype(jnp.float32)


def _choose_batch_tile(batch, row_bytes_in, row_bytes_out,
                       vmem_tile_budget=24 * 1024 * 1024, min_split=256):
    """Adaptive batch tile.

    * Largest tile whose double-buffered input + output streams fit the VMEM
      byte budget (budget sized for v7x's 64 MiB physical VMEM, leaving room
      for the resident weight/bias buffers and compiler scratch under the
      48 MiB vmem_limit below).
    * For batch >= min_split, force >= 2 grid steps so the "parallel" batch
      axis can shard across both v7x TensorCores; on single-TC v5e/v6e the
      extra step costs only ~0.35 us.
    * Tiles smaller than the full batch are rounded to a multiple of 8
      (sublane); a full-batch tile may be any size.
    """
    if batch <= 8:
        return batch
    per_row = 2 * (row_bytes_in + row_bytes_out)     # double-buffered streams
    cap = max(8, vmem_tile_budget // max(per_row, 1))
    target = pl.cdiv(batch, 2) if batch >= min_split else batch
    tb = _round_up(min(target, cap), 8)
    return batch if tb >= batch else tb


@functools.partial(jax.jit, static_argnames=("num_outputs",))
def beta_forward(x, w_fused, b_fused, *, num_outputs):
    """x: [B, D_in]; w_fused: [D_in, P] bf16; b_fused: [1, P] f32."""
    B, d_in = x.shape
    p = w_fused.shape[1]                       # round_up(2*num_outputs, 128)
    out_dtype = x.dtype                        # storage dtype follows the input
    in_bytes = jnp.dtype(x.dtype).itemsize
    out_bytes = jnp.dtype(out_dtype).itemsize

    tb = _choose_batch_tile(B, row_bytes_in=d_in * in_bytes,
                            row_bytes_out=p * out_bytes)
    grid = (pl.cdiv(B, tb),)

    cost = pl.CostEstimate(
        flops=2 * B * d_in * p,
        transcendentals=2 * B * p,             # exp + log1p per head element
        bytes_accessed=(B * d_in * in_bytes    # read x
                        + d_in * p * 2 + p * 4 # resident bf16 weight + f32 bias
                        + B * p * out_bytes),  # write head slab
    )

    # Weight/bias use constant index maps so the pipeline fetches them once and
    # they stay VMEM-resident across all grid steps.
    # TODO(synk): switch these two specs to pipeline_mode=pl.Buffered(1) once
    # single-buffered BlockSpecs are confirmed on the target jax/Mosaic version
    # (reclaims one redundant weight-sized VMEM buffer for very wide heads).
    ab = pl.pallas_call(
        beta_heads_kernel,
        out_shape=jax.ShapeDtypeStruct((B, p), out_dtype),
        grid=grid,
        in_specs=[
            pl.BlockSpec((tb, d_in), lambda i: (i, 0)),   # x: batch-tiled
            pl.BlockSpec((d_in, p), lambda i: (0, 0)),    # fused weight (resident)
            pl.BlockSpec((1, p), lambda i: (0, 0)),       # fused bias   (resident)
        ],
        out_specs=pl.BlockSpec((tb, p), lambda i: (i, 0)),
        compiler_params=pltpu.CompilerParams(
            dimension_semantics=("parallel",),
            vmem_limit_bytes=48 * 1024 * 1024,
        ),
        cost_estimate=cost,
    )(x, w_fused, b_fused)

    # Module semantics: forward returns FixedBernoulli(logits=x).  logits == x
    # exactly (no copy); probs is a single fused XLA elementwise op (review
    # option (a)) — the PyTorch module never materializes it at all.
    logits = x
    probs = jax.nn.sigmoid(x)

    # alpha/beta are computed-then-discarded by the module; they are sliced out
    # of the padded head slab here only so the demo can verify them.
    alpha = ab[:, :num_outputs]
    beta = ab[:, num_outputs:2 * num_outputs]
    return logits, probs, alpha, beta


if __name__ == "__main__":
    B = 8             # batch
    num_inputs = 32   # hidden features
    num_outputs = 16  # action dims for alpha/beta heads

    key = jax.random.PRNGKey(0)
    kx, ka, kb = jax.random.split(key, 3)

    x = jax.random.normal(kx, (B, num_inputs), dtype=jnp.float32)

    # Deterministic init mirroring the module: orthogonal_ weights (gain=1),
    # zero biases (zll=False path).
    ortho = jax.nn.initializers.orthogonal()
    w_alpha = ortho(ka, (num_outputs, num_inputs), jnp.float32)
    w_beta = ortho(kb, (num_outputs, num_inputs), jnp.float32)
    b_alpha = jnp.zeros((num_outputs,), jnp.float32)
    b_beta = jnp.zeros((num_outputs,), jnp.float32)

    # Parameter fusion + lane padding + bf16 cast happen once, off the hot path.
    w_fused, b_fused = fuse_params(w_alpha, b_alpha, w_beta, b_beta)

    logits, probs, alpha, beta = beta_forward(x, w_fused, b_fused,
                                              num_outputs=num_outputs)
    jax.block_until_ready((logits, probs, alpha, beta))

    # --- Reference checks ---------------------------------------------------
    ref_logits = x
    ref_probs = jax.nn.sigmoid(x)

    # bf16-matched reference (kernel uses bf16 MXU operands, f32 accumulation).
    xb = x.astype(jnp.bfloat16)
    ref_alpha = jax.nn.softplus(
        jnp.dot(xb, w_alpha.T.astype(jnp.bfloat16),
                preferred_element_type=jnp.float32) + b_alpha) + 1.0
    ref_beta = jax.nn.softplus(
        jnp.dot(xb, w_beta.T.astype(jnp.bfloat16),
                preferred_element_type=jnp.float32) + b_beta) + 1.0

    # Full-f32 module math (loose: differs only by bf16 operand rounding).
    ref_alpha_f32 = jax.nn.softplus(x @ w_alpha.T + b_alpha) + 1.0
    ref_beta_f32 = jax.nn.softplus(x @ w_beta.T + b_beta) + 1.0

    assert jnp.allclose(logits, ref_logits)
    assert jnp.allclose(probs, ref_probs, atol=1e-5)
    assert jnp.allclose(alpha, ref_alpha, atol=1e-4)
    assert jnp.allclose(beta, ref_beta, atol=1e-4)
    assert jnp.allclose(alpha, ref_alpha_f32, atol=5e-2)
    assert jnp.allclose(beta, ref_beta_f32, atol=5e-2)

    print("KERNEL_OK")
</pallas_src>

<mosaic_0001>
module attributes {stable_mosaic.version = 11 : i64} {
  func.func @beta_heads_kernel(%arg0: i32, %arg1: memref<8x32xf32, #tpu.memory_space<vmem>>, %arg2: memref<32x128xbf16, #tpu.memory_space<vmem>>, %arg3: memref<1x128xf32, #tpu.memory_space<vmem>>, %arg4: memref<8x128xf32, #tpu.memory_space<vmem>>) attributes {dimension_semantics = [#tpu.dimension_semantics<parallel>], iteration_bounds = array<i64: 1>, scalar_prefetch = 0 : i64, scratch_operands = 0 : i64, tpu.core_type = #tpu.core_type<tc>, window_params = [{transform_indices = @transform_0, window_bounds = array<i64: 8, 32>}, {pipeline_mode = #tpu.pipeline_mode<synchronous>, transform_indices = @transform_1, window_bounds = array<i64: 32, 128>}, {pipeline_mode = #tpu.pipeline_mode<synchronous>, transform_indices = @transform_2, window_bounds = array<i64: 1, 128>}, {transform_indices = @transform_3, window_bounds = array<i64: 8, 128>}]} {
    %c0 = arith.constant 0 : index
    %c0_0 = arith.constant 0 : index
    %0 = vector.load %arg1[%c0, %c0_0] : memref<8x32xf32, #tpu.memory_space<vmem>>, vector<8x32xf32>
    %1 = arith.truncf %0 : vector<8x32xf32> to vector<8x32xbf16>
    %c0_1 = arith.constant 0 : index
    %c0_2 = arith.constant 0 : index
    %2 = vector.load %arg2[%c0_1, %c0_2] : memref<32x128xbf16, #tpu.memory_space<vmem>>, vector<32x128xbf16>
    %cst = arith.constant dense<0.000000e+00> : vector<8x128xf32>
    %3 = tpu.matmul %1, %2, %cst {dimension_numbers = #tpu.dot_dimension_numbers<[1], [0], [0], [1], [0, 0, 1, 1], [], []>} : vector<8x32xbf16>, vector<32x128xbf16>, vector<8x128xf32> -> vector<8x128xf32>
    %c0_3 = arith.constant 0 : index
    %c0_4 = arith.constant 0 : index
    %4 = vector.load %arg3[%c0_3, %c0_4] : memref<1x128xf32, #tpu.memory_space<vmem>>, vector<1x128xf32>
    %5 = vector.broadcast %4 : vector<1x128xf32> to vector<8x128xf32>
    %6 = arith.addf %3, %5 : vector<8x128xf32>
    %cst_5 = arith.constant 0.000000e+00 : f32
    %7 = vector.broadcast %cst_5 : f32 to vector<8x128xf32>
    %8 = arith.maximumf %6, %7 : vector<8x128xf32>
    %9 = math.absf %6 : vector<8x128xf32>
    %cst_6 = arith.constant 0.000000e+00 : f32
    %10 = vector.broadcast %cst_6 : f32 to vector<8x128xf32>
    %11 = arith.subf %10, %9 : vector<8x128xf32>
    %12 = math.exp %11 : vector<8x128xf32>
    %13 = math.log1p %12 : vector<8x128xf32>
    %14 = arith.addf %8, %13 : vector<8x128xf32>
    %cst_7 = arith.constant 1.000000e+00 : f32
    %15 = vector.broadcast %cst_7 : f32 to vector<8x128xf32>
    %16 = arith.addf %14, %15 : vector<8x128xf32>
    %c0_8 = arith.constant 0 : index
    %c0_9 = arith.constant 0 : index
    %17 = vector.load %arg4[%c0_8, %c0_9] : memref<8x128xf32, #tpu.memory_space<vmem>>, vector<8x128xf32>
    tpu.vector_store %arg4[%c0_8, %c0_9], %16 {strides = array<i32>} : memref<8x128xf32, #tpu.memory_space<vmem>>, vector<8x128xf32>,
    return
  }
  func.func @transform_0(%arg0: i32) -> (i32, i32) {
    %c0_i32 = arith.constant 0 : i32
    %c0_i32_0 = arith.constant 0 : i32
    return %arg0, %c0_i32 : i32, i32
  }
  func.func @transform_1(%arg0: i32) -> (i32, i32) {
    %c0_i32 = arith.constant 0 : i32
    %c0_i32_0 = arith.constant 0 : i32
    %c0_i32_1 = arith.constant 0 : i32
    return %c0_i32, %c0_i32_0 : i32, i32
  }
  func.func @transform_2(%arg0: i32) -> (i32, i32) {
    %c0_i32 = arith.constant 0 : i32
    %c0_i32_0 = arith.constant 0 : i32
    %c0_i32_1 = arith.constant 0 : i32
    return %c0_i32, %c0_i32_0 : i32, i32
  }
  func.func @transform_3(%arg0: i32) -> (i32, i32) {
    %c0_i32 = arith.constant 0 : i32
    %c0_i32_0 = arith.constant 0 : i32
    return %arg0, %c0_i32 : i32, i32
  }
}

</mosaic_0001>

<llo_original>
// kernel: beta_forward.1
$region0: #{beta_forward.1}
  #allocation0 [shape = 'u32[]', space=smem, size = 0x4, offset = 0x4, fixed_abs, tag = 'smem constant byte address 0x4 - core index']
  #allocation1 [shape = 'u32[144,128]{1,0:T(1,128)}', space=vmem, size = 0x12000, scoped, tag = 'internal scratch']
  %s0 = inlined_call_operand.hbm [shape: f32[8,32], index: 0, kind: input, shape index: {}]
  %s1 = inlined_call_operand.hbm [shape: bf16[32,128], index: 1, kind: input, shape index: {}]
  %s2 = inlined_call_operand.vmem [shape: f32[1,128], index: 2, kind: input, shape index: {}]
  %s3 = inlined_call_operand.vmem [shape: f32[8,128], index: 3, kind: output, shape index: {}]
  %s4 = sld [smem:[#allocation0]]
  $region30: #{beta_forward.1} parent=0
    _
  %s6 = ssub.s32 1, %s4
  %s7 = scalar_select 0, %s6, %s4
  $region1: #{beta_forward.1} parent=0
    #allocation2 [shape = 'u8[4096]{0}', space=vmem, size = 0x1000, scoped, tag = 'input window, operand 0, single buffered']
    #allocation3 [shape = 's32[1]{0}', space=sflag, size = 0x4, scoped, tag = 'scoped memory for beta_forward.1']
    #allocation4 [shape = 'u8[8192]{0}', space=vmem, size = 0x2000, scoped, tag = 'input window, operand 1, single buffered']
    #allocation5 [shape = 's32[1]{0}', space=sflag, size = 0x4, scoped, tag = 'scoped memory for beta_forward.1']
    %8 = vsyncpa [#allocation3], 0
    %9 = vsyncpa [#allocation5], 0
    // Predicated region
    $region2: #{beta_forward.1} parent=1 // pred_check
      _
    $region3: #{beta_forward.1} parent=1 // pred_check_branch
      %11 = sbr.rel (0) target = $region5
    $region4: #{beta_forward.1} parent=1 // pred_region
      %s13 = ssub.s32 128, 128
      %14 = vsyncadd [#allocation3], %s13
      %s16 = sshll.u32 [#allocation2], 4
      %s17 = int_to_ptr.vmem [resolvable:$true] %s16
      %19 = dma.hbm_to_vmem [thread:$0]  %s0, 128, %s17, [#allocation3]
    $region5: #{beta_forward.1} parent=1 // pred_fallthru
      _
    // Predicated region
    $region6: #{beta_forward.1} parent=1 // pred_check
      _
    $region7: #{beta_forward.1} parent=1 // pred_check_branch
      %21 = sbr.rel (0) target = $region9
    $region8: #{beta_forward.1} parent=1 // pred_region
      %s23 = ssub.s32 256, 256
      %24 = vsyncadd [#allocation5], %s23
      %s25 = sshll.u32 [#allocation4], 4
      %s26 = int_to_ptr.vmem [resolvable:$true] %s25
      %31 = dma.hbm_to_vmem [thread:$0]  %s1, 256, %s26, [#allocation5], 64, 64, 4
    $region9: #{beta_forward.1} parent=1 // pred_fallthru
      _
    // Predicated region
    $region10: #{beta_forward.1} parent=1 // pred_check
      _
    $region11: #{beta_forward.1} parent=1 // pred_check_branch
      %33 = sbr.rel (0) target = $region13
    $region12: #{beta_forward.1} parent=1 // pred_region
      _
    $region13: #{beta_forward.1} parent=1 // pred_fallthru
      _
    // Predicated region
    $region14: #{beta_forward.1} parent=1 // pred_check
      _
    $region15: #{beta_forward.1} parent=1 // pred_check_branch
      %35 = sbr.rel (0) target = $region17
    $region16: #{beta_forward.1} parent=1 // pred_region
      %36 = dma.done [#allocation3], 128
    $region17: #{beta_forward.1} parent=1 // pred_fallthru
      _
    // Predicated region
    $region18: #{beta_forward.1} parent=1 // pred_check
      _
    $region19: #{beta_forward.1} parent=1 // pred_check_branch
      %38 = sbr.rel (0) target = $region21
    $region20: #{beta_forward.1} parent=1 // pred_region
      %39 = dma.done [#allocation5], 256
    $region21: #{beta_forward.1} parent=1 // pred_fallthru
      _
    %v41 = vld [vmem:[#allocation2] sm:$0xff]
    %v42 = vpack.c.bf16 %v41, %v41
    %v43 = vld [vmem:[#allocation4] sm:$0xf]
    %v44 = vld [vmem:[#allocation4 + $0x4] sm:$0xf]
    %v45 = vld [vmem:[#allocation4 + $0x8] sm:$0xf]
    %v46 = vld [vmem:[#allocation4 + $0xc] sm:$0xf]
    %v47 = vld [vmem:[%s2] sm:$0x1]
    %v49 = vlaneseq
    %v50 = vshrl.u32 %v49, 7
    %v51 = vsub.s32 0, %v50
    %v52 = vrot.slane %v47, %v51
    %v58 = vunpack.c.l.b16 %v43
    %v59 = vunpack.c.l.b16 %v44
    %v60 = vunpack.c.l.b16 %v45
    %v61 = vunpack.c.l.b16 %v46
    %v62 = vpack.c.b16 %v59, %v58
    %v63 = vpack.c.b16 %v61, %v60
    %vm66 = vcmask 261120
    %v68 = vsel %vm66, %v42, 0
    %70 = vmatprep.subr.bf16.mxu0 0
    %71 = vmatpush1.bf16.msra.mxu0 %v62
    %72 = vmatprep.subr.bf16.mxu0 0
    %73 = vmatpush1.bf16.msra.mxu0 %v63
    %74 = vmatprep.subr.bf16.mxu0 0
    %75 = vmatpush1.bf16.msra.mxu0 0
    %76 = vmatprep.subr.bf16.mxu0 0
    %77 = vmatpush1.bf16.msra.mxu0 0
    %78 = vmatprep.subr.bf16.mxu0 0
    %79 = vmatpush1.bf16.msra.mxu0 0
    %80 = vmatprep.subr.bf16.mxu0 0
    %81 = vmatpush1.bf16.msra.mxu0 0
    %82 = vmatprep.subr.bf16.mxu0 0
    %83 = vmatpush1.bf16.msra.mxu0 0
    %84 = vmatprep.subr.bf16.mxu0 0
    %85 = vmatpush1.bf16.msra.mxu0 0
    %86 = vmatprep.subr.bf16.mxu0 0
    %87 = vmatpush1.bf16.msra.mxu0 0
    %88 = vmatprep.subr.bf16.mxu0 0
    %89 = vmatpush1.bf16.msra.mxu0 0
    %90 = vmatprep.subr.bf16.mxu0 0
    %91 = vmatpush1.bf16.msra.mxu0 0
    %92 = vmatprep.subr.bf16.mxu0 0
    %93 = vmatpush1.bf16.msra.mxu0 0
    %94 = vmatprep.subr.bf16.mxu0 0
    %95 = vmatpush1.bf16.msra.mxu0 0
    %96 = vmatprep.subr.bf16.mxu0 0
    %97 = vmatpush1.bf16.msra.mxu0 0
    %98 = vmatprep.subr.bf16.mxu0 0
    %99 = vmatpush1.bf16.msra.mxu0 0
    %100 = vmatprep.subr.bf16.mxu0 0
    %101 = vmatpush1.bf16.msra.mxu0 0
    %102 = vmatprep.mubr.bf16.mxu0 0
    %103 = vmatmul.mubr.bf16.gmra.mrb[0].mxu0 %v68
    %v104 = vpop.f32.mrb[0].mxu0
    %v105 = vadd.f32 %v52, %v104
    %v106 = vpop.f32.mrb[0].mxu0
    %v107 = vpop.f32.mrb[0].mxu0
    %v108 = vpop.f32.mrb[0].mxu0
    %109 = vdwg.mxu0
    %v110 = vmax.f32 %v105, 0.0
    %v111 = vand.u32 2147483647, %v105
    %v112 = vsub.f32 0.0, %v111
    %v113 = vmul.f32 %v112, 1.442695
    %v114 = vpow.pop %v113
    %v115 = vadd.f32 %v114, 1.0
    %v116 = vlog2.pop %v115
    %v117 = vmul.f32 %v116, 0.6931472
    %v118 = vmul.f32 -0.5, %v114
    %v119 = vadd.f32 %v118, 1.0
    %v120 = vmul.f32 %v119, %v114
    %v121 = vand.u32 2147483647, %v114
    %vm122 = vcmp.lt.f32.partialorder %v121, 0.0004427343
    %v123 = vsel %vm122, %v120, %v117
    %v124 = vadd.f32 %v110, %v123
    %v125 = vadd.f32 %v124, 1.0
    %126 = vst [vmem:[%s3] sm:$0xff] %v125
    // Predicated region
    $region22: #{beta_forward.1} parent=1 // pred_check
      _
    $region23: #{beta_forward.1} parent=1 // pred_check_branch
      %128 = sbr.rel (0) target = $region25
    $region24: #{beta_forward.1} parent=1 // pred_region
      _
    $region25: #{beta_forward.1} parent=1 // pred_fallthru
      _
    // Predicated region
    $region26: #{beta_forward.1} parent=1 // pred_check
      _
    $region27: #{beta_forward.1} parent=1 // pred_check_branch
      %130 = sbr.rel (0) target = $region29
    $region28: #{beta_forward.1} parent=1 // pred_region
      _
    $region29: #{beta_forward.1} parent=1 // pred_fallthru
      _
    %131 = vsyncpa [#allocation3], 1
    %132 = vsyncpa [#allocation5], 1

</llo_original>
